<compile_context>
chip_gen: v5e
topology: v5e:2x2
jax: 0.10.0
libtpu: 0.0.40
codegen_flags: <defaults>
</compile_context>

<pallas_src>
import math
from functools import partial

import numpy as np
import jax
import jax.numpy as jnp
from jax import lax
from jax.experimental import pallas as pl
from jax.experimental.pallas import tpu as pltpu


def _t_slices_kernel(ar_ref, ai_ref, br_ref, bi_ref, w_ref, cr_ref, ci_ref, *, bw_first):
    """C_k = (A_k @ B_k) @ W for a block of TK Fourier slices, K in lanes.

    ar/ai: (N0, N1, TK)   real / imag planes of A_k
    br/bi: (N1, Fin, TK)  real / imag planes of B_k
    w:     (Fin, Fout, 1) real weight (lane dim broadcasts over K)
    cr/ci: (N0, Fout, TK) real / imag planes of C_k
    All float32; the contraction over N1/Fin is lane-wide VPU FMAs.
    """
    n0, n1, tk = ar_ref.shape
    fin, fout, _ = w_ref.shape

    ar = ar_ref[...]
    ai = ai_ref[...]
    br = br_ref[...]
    bi = bi_ref[...]
    w = w_ref[...]            # VMEM-resident (constant index_map), loaded once per step

    # TODO(synk): for large N0/N1/Fin (>=128) an MXU-tiled path with an extra N-tiling
    # grid axis + VMEM accumulator would beat these unrolled VPU loops.
    if bw_first:
        # D_k = B_k @ W first (fewer MACs when Fout < Fin), then C_k = A_k @ D_k.
        dr = jnp.zeros((n1, fout, tk), jnp.float32)
        di = jnp.zeros((n1, fout, tk), jnp.float32)
        for f in range(fin):
            wf = w[f:f + 1, :, :]                      # (1, fout, 1)
            dr = dr + br[:, f:f + 1, :] * wf
            di = di + bi[:, f:f + 1, :] * wf
        cr = jnp.zeros((n0, fout, tk), jnp.float32)
        ci = jnp.zeros((n0, fout, tk), jnp.float32)
        for j in range(n1):
            arj = ar[:, j:j + 1, :]                    # (n0, 1, tk)
            aij = ai[:, j:j + 1, :]
            drj = dr[j:j + 1, :, :]                    # (1, fout, tk)
            dij = di[j:j + 1, :, :]
            cr = cr + arj * drj - aij * dij
            ci = ci + arj * dij + aij * drj
    else:
        # T_k = A_k @ B_k, then C_k = T_k @ W (W real -> two real projections).
        tr = jnp.zeros((n0, fin, tk), jnp.float32)
        ti = jnp.zeros((n0, fin, tk), jnp.float32)
        for j in range(n1):
            arj = ar[:, j:j + 1, :]                    # (n0, 1, tk)
            aij = ai[:, j:j + 1, :]
            brj = br[j:j + 1, :, :]                    # (1, fin, tk)
            bij = bi[j:j + 1, :, :]
            tr = tr + arj * brj - aij * bij
            ti = ti + arj * bij + aij * brj
        cr = jnp.zeros((n0, fout, tk), jnp.float32)
        ci = jnp.zeros((n0, fout, tk), jnp.float32)
        for f in range(fin):
            wf = w[f:f + 1, :, :]                      # (1, fout, 1)
            cr = cr + tr[:, f:f + 1, :] * wf
            ci = ci + ti[:, f:f + 1, :] * wf

    cr_ref[...] = cr
    ci_ref[...] = ci


def _ceil_to(x, m):
    return ((x + m - 1) // m) * m


def _padded_f32_bytes(lead, sub, lane):
    """VMEM footprint of a float32 (lead, sub, lane) tile after (8,128) padding."""
    return 4 * lead * _ceil_to(max(sub, 1), 8) * _ceil_to(max(lane, 1), 128)


def _tpu_info():
    try:
        return pltpu.get_tpu_info()
    except Exception:
        return None


def _vmem_capacity_bytes():
    info = _tpu_info()
    cap = getattr(info, "vmem_capacity_bytes", None) if info is not None else None
    if cap:
        return int(cap)
    return 64 * 1024 * 1024          # conservative (v7x-sized) fallback


def _num_tensorcores():
    info = _tpu_info()
    if info is not None:
        for name in ("num_tensorcores", "tensorcore_count", "num_cores",
                     "cores_per_chip", "core_count"):
            v = getattr(info, name, None)
            try:
                v = int(v)
            except (TypeError, ValueError):
                continue
            if v > 0:
                return v
    return 1


def _pick_tk(kspec, n0, n1, fin, fout, vmem_cap):
    """Largest 128-multiple lane tile whose PADDED VMEM footprint fits the budget."""
    if kspec <= 128:
        return kspec                                   # single full-extent block, no padding
    budget = int(vmem_cap * 0.45)
    tk = 128
    for cand in (2048, 1024, 512, 256, 128):
        streams = 2 * (_padded_f32_bytes(n0, n1, cand)        # ar + ai
                       + _padded_f32_bytes(n1, fin, cand)     # br + bi
                       + _padded_f32_bytes(n0, fout, cand))   # cr + ci
        interm = (2 * _padded_f32_bytes(n0, fin, cand)
                  + 2 * _padded_f32_bytes(n1, fout, cand)
                  + 4 * _padded_f32_bytes(n0, fout, cand))
        total = 2 * streams + interm + _padded_f32_bytes(fin, fout, 1)  # 2x = double buffer
        if total <= budget:
            tk = cand
            break
    tk = min(tk, _ceil_to(kspec, 128))                 # never tile wider than padded K
    if _num_tensorcores() >= 2 and kspec > 128:
        # keep grid >= 2 so both TensorCores (v7x) get work; skip on 1-TC chips
        tk = min(tk, 128 * max(1, pl.cdiv(kspec, 2 * 128)))
    return tk


def t_spectral_conv(S, X, W):
    """JAX/Pallas implementation of TSpectralConvolution.forward (t-product conv).

    Returns (C, power_im); the caller applies the powerIm < 1e-10 real/complex branch,
    mirroring the data-dependent branch in the torch module.
    """
    p = S.ndim
    N0, N1 = int(S.shape[0]), int(S.shape[1])
    Fin, Fout = int(W.shape[0]), int(W.shape[1])
    spatial = tuple(int(d) for d in S.shape[2:])
    fft_axes = tuple(range(2, p))

    real_in = (not jnp.issubdtype(S.dtype, jnp.complexfloating)
               and not jnp.issubdtype(X.dtype, jnp.complexfloating))
    use_rfft = real_in and len(fft_axes) > 0

    # TODO(synk): FFT has no Pallas primitive; the transform stays in jnp.fft.
    if use_rfft:
        # Real inputs -> Hermitian spectrum: keep only the unique half along the last
        # spatial axis (irfftn reconstructs exactly) -> ~2x fewer slices / bytes / FLOPs.
        A = jnp.fft.rfftn(S.astype(jnp.float32), axes=fft_axes)
        B = jnp.fft.rfftn(X.astype(jnp.float32), axes=fft_axes)
    elif fft_axes:
        A = jnp.fft.fftn(S.astype(jnp.complex64), axes=fft_axes)
        B = jnp.fft.fftn(X.astype(jnp.complex64), axes=fft_axes)
    else:
        A = S.astype(jnp.complex64)
        B = X.astype(jnp.complex64)

    spec_shape = tuple(int(d) for d in A.shape[2:])
    K = int(np.prod(spec_shape)) if spec_shape else 1

    # Natural post-FFT layout already has the slice axis last -> no slice-major transpose.
    A3 = A.reshape(N0, N1, K)
    B3 = B.reshape(N1, Fin, K)

    vmem_cap = _vmem_capacity_bytes()
    tk = _pick_tk(K, N0, N1, Fin, Fout, vmem_cap)
    Kp = pl.cdiv(K, tk) * tk
    pad = Kp - K

    def planes(z, pad_amt):
        zr = jnp.real(z).astype(jnp.float32)
        zi = jnp.imag(z).astype(jnp.float32)
        if pad_amt:
            cfg = ((0, 0), (0, 0), (0, pad_amt))
            zr = jnp.pad(zr, cfg)        # fused with the real/imag extraction under jit
            zi = jnp.pad(zi, cfg)
        return zr, zi

    ar, ai = planes(A3, pad)
    br, bi = planes(B3, pad)

    # W is real (the torch cast to complex64 carries a zero imaginary part); lay it out
    # so Fout sits on sublanes and the unit lane dim broadcasts over K inside the kernel.
    Wf = jnp.real(W).astype(jnp.float32).reshape(Fin, Fout, 1)

    grid = (Kp // tk,)
    a_spec = pl.BlockSpec((N0, N1, tk), lambda kb: (0, 0, kb))
    b_spec = pl.BlockSpec((N1, Fin, tk), lambda kb: (0, 0, kb))
    w_spec = pl.BlockSpec((Fin, Fout, 1), lambda kb: (0, 0, 0))   # VMEM-resident
    c_spec = pl.BlockSpec((N0, Fout, tk), lambda kb: (0, 0, kb))

    vmem_limit = int(min(vmem_cap * 3 // 4, 100 * 1024 * 1024))

    kernel = partial(_t_slices_kernel, bw_first=(Fout < Fin))
    cr, ci = pl.pallas_call(
        kernel,
        out_shape=(jax.ShapeDtypeStruct((N0, Fout, Kp), jnp.float32),
                   jax.ShapeDtypeStruct((N0, Fout, Kp), jnp.float32)),
        grid_spec=pltpu.PrefetchScalarGridSpec(
            num_scalar_prefetch=0,
            grid=grid,
            in_specs=[a_spec, a_spec, b_spec, b_spec, w_spec],
            out_specs=[c_spec, c_spec],
        ),
        compiler_params=pltpu.CompilerParams(
            dimension_semantics=("parallel",),
            vmem_limit_bytes=vmem_limit),
    )(ar, ai, br, bi, Wf)

    cr = cr[:, :, :K]
    ci = ci[:, :, :K]

    if use_rfft:
        C_hat = lax.complex(cr, ci).reshape((N0, Fout) + spec_shape)
        C = jnp.fft.irfftn(C_hat, s=spatial, axes=fft_axes)   # exactly real by construction
        power_im = jnp.zeros((), jnp.float32)
    else:
        C = lax.complex(cr, ci).reshape((N0, Fout) + spec_shape)
        for i in reversed(fft_axes):
            C = jnp.fft.ifft(C, axis=i)
        power_im = jnp.sum(jnp.imag(C) ** 2)
    return C, power_im


if __name__ == "__main__":
    # small shapes consistent with the module: S (N,N,*spatial), X (N,Fin,*spatial), W (Fin,Fout)
    N, Fin, Fout = 8, 4, 8
    spatial = (4, 4)                               # two FFT ("slice") dims
    key = jax.random.PRNGKey(0)
    k1, k2, k3 = jax.random.split(key, 3)

    S = jax.random.normal(k1, (N, N) + spatial, dtype=jnp.float32)
    X = jax.random.normal(k2, (N, Fin) + spatial, dtype=jnp.float32)
    std = 1.0 / math.sqrt(Fout)
    W = jax.random.uniform(k3, (Fin, Fout), dtype=jnp.float32, minval=-std, maxval=std)

    fwd = jax.jit(t_spectral_conv)
    C, power_im = fwd(S, X, W)
    C = jax.block_until_ready(C)
    power_im = float(jax.block_until_ready(power_im))
    if power_im < 1e-10:                           # same data-dependent branch as the torch module
        C = jnp.real(C)

    # pure-JAX reference (original full-FFT slice-by-slice math) for a correctness check
    A_hat = S.astype(jnp.complex64)
    B_hat = X.astype(jnp.complex64)
    for i in range(2, S.ndim):
        A_hat = jnp.fft.fft(A_hat, axis=i)
        B_hat = jnp.fft.fft(B_hat, axis=i)
    K = int(np.prod(spatial))
    Af = A_hat.reshape(N, N, K)
    Bf = B_hat.reshape(N, Fin, K)
    T = jnp.einsum('ijk,jfk->ifk', Af, Bf)
    C_hat = jnp.einsum('ifk,fo->iok', T, W.astype(jnp.complex64))
    C_ref = C_hat.reshape((N, Fout) + spatial)
    for i in reversed(range(2, S.ndim)):
        C_ref = jnp.fft.ifft(C_ref, axis=i)
    # real inputs => the exact result is real; the float32 FFT round trip only leaves
    # ~1e-5 imaginary noise, so compare real parts.
    C_ref = jnp.real(C_ref)
    C_cmp = jnp.real(C)

    assert C.shape == (N, Fout) + spatial, f"bad output shape {C.shape}"
    assert jnp.allclose(C_cmp, C_ref, atol=2e-3, rtol=2e-3), "Pallas result mismatch vs reference"
    print("KERNEL_OK")
</pallas_src>

<mosaic_0001>
module attributes {stable_mosaic.version = 11 : i64} {
  func.func @_t_slices_kernel(%arg0: i32, %arg1: memref<8x8x12xf32, #tpu.memory_space<vmem>>, %arg2: memref<8x8x12xf32, #tpu.memory_space<vmem>>, %arg3: memref<8x4x12xf32, #tpu.memory_space<vmem>>, %arg4: memref<8x4x12xf32, #tpu.memory_space<vmem>>, %arg5: memref<4x8x1xf32, #tpu.memory_space<vmem>>, %arg6: memref<8x8x12xf32, #tpu.memory_space<vmem>>, %arg7: memref<8x8x12xf32, #tpu.memory_space<vmem>>) attributes {dimension_semantics = [#tpu.dimension_semantics<parallel>], iteration_bounds = array<i64: 1>, scalar_prefetch = 0 : i64, scratch_operands = 0 : i64, tpu.core_type = #tpu.core_type<tc>, window_params = [{transform_indices = @transform_0, window_bounds = array<i64: 8, 8, 12>}, {transform_indices = @transform_1, window_bounds = array<i64: 8, 8, 12>}, {transform_indices = @transform_2, window_bounds = array<i64: 8, 4, 12>}, {transform_indices = @transform_3, window_bounds = array<i64: 8, 4, 12>}, {pipeline_mode = #tpu.pipeline_mode<synchronous>, transform_indices = @transform_4, window_bounds = array<i64: 4, 8, 1>}, {transform_indices = @transform_5, window_bounds = array<i64: 8, 8, 12>}, {transform_indices = @transform_6, window_bounds = array<i64: 8, 8, 12>}]} {
    %c0 = arith.constant 0 : index
    %c0_0 = arith.constant 0 : index
    %c0_1 = arith.constant 0 : index
    %0 = vector.load %arg1[%c0, %c0_0, %c0_1] : memref<8x8x12xf32, #tpu.memory_space<vmem>>, vector<8x8x12xf32>
    %c0_2 = arith.constant 0 : index
    %c0_3 = arith.constant 0 : index
    %c0_4 = arith.constant 0 : index
    %1 = vector.load %arg2[%c0_2, %c0_3, %c0_4] : memref<8x8x12xf32, #tpu.memory_space<vmem>>, vector<8x8x12xf32>
    %c0_5 = arith.constant 0 : index
    %c0_6 = arith.constant 0 : index
    %c0_7 = arith.constant 0 : index
    %2 = vector.load %arg3[%c0_5, %c0_6, %c0_7] : memref<8x4x12xf32, #tpu.memory_space<vmem>>, vector<8x4x12xf32>
    %c0_8 = arith.constant 0 : index
    %c0_9 = arith.constant 0 : index
    %c0_10 = arith.constant 0 : index
    %3 = vector.load %arg4[%c0_8, %c0_9, %c0_10] : memref<8x4x12xf32, #tpu.memory_space<vmem>>, vector<8x4x12xf32>
    %c0_11 = arith.constant 0 : index
    %c0_12 = arith.constant 0 : index
    %c0_13 = arith.constant 0 : index
    %4 = vector.load %arg5[%c0_11, %c0_12, %c0_13] : memref<4x8x1xf32, #tpu.memory_space<vmem>>, vector<4x8x1xf32>
    %cst = arith.constant 0.000000e+00 : f32
    %5 = vector.broadcast %cst : f32 to vector<8x4x12xf32>
    %cst_14 = arith.constant 0.000000e+00 : f32
    %6 = vector.broadcast %cst_14 : f32 to vector<8x4x12xf32>
    %7 = vector.extract_strided_slice %0 {offsets = [0, 0, 0], sizes = [8, 1, 12], strides = [1, 1, 1]} : vector<8x8x12xf32> to vector<8x1x12xf32>
    %8 = vector.extract_strided_slice %1 {offsets = [0, 0, 0], sizes = [8, 1, 12], strides = [1, 1, 1]} : vector<8x8x12xf32> to vector<8x1x12xf32>
    %9 = vector.extract_strided_slice %2 {offsets = [0, 0, 0], sizes = [1, 4, 12], strides = [1, 1, 1]} : vector<8x4x12xf32> to vector<1x4x12xf32>
    %10 = vector.extract_strided_slice %3 {offsets = [0, 0, 0], sizes = [1, 4, 12], strides = [1, 1, 1]} : vector<8x4x12xf32> to vector<1x4x12xf32>
    %11 = vector.broadcast %7 : vector<8x1x12xf32> to vector<8x4x12xf32>
    %12 = vector.broadcast %9 : vector<1x4x12xf32> to vector<8x4x12xf32>
    %13 = arith.mulf %11, %12 : vector<8x4x12xf32>
    %14 = arith.addf %5, %13 : vector<8x4x12xf32>
    %15 = vector.broadcast %8 : vector<8x1x12xf32> to vector<8x4x12xf32>
    %16 = vector.broadcast %10 : vector<1x4x12xf32> to vector<8x4x12xf32>
    %17 = arith.mulf %15, %16 : vector<8x4x12xf32>
    %18 = arith.subf %14, %17 : vector<8x4x12xf32>
    %19 = vector.broadcast %7 : vector<8x1x12xf32> to vector<8x4x12xf32>
    %20 = vector.broadcast %10 : vector<1x4x12xf32> to vector<8x4x12xf32>
    %21 = arith.mulf %19, %20 : vector<8x4x12xf32>
    %22 = arith.addf %6, %21 : vector<8x4x12xf32>
    %23 = vector.broadcast %8 : vector<8x1x12xf32> to vector<8x4x12xf32>
    %24 = vector.broadcast %9 : vector<1x4x12xf32> to vector<8x4x12xf32>
    %25 = arith.mulf %23, %24 : vector<8x4x12xf32>
    %26 = arith.addf %22, %25 : vector<8x4x12xf32>
    %27 = vector.extract_strided_slice %0 {offsets = [0, 1, 0], sizes = [8, 1, 12], strides = [1, 1, 1]} : vector<8x8x12xf32> to vector<8x1x12xf32>
    %28 = vector.extract_strided_slice %1 {offsets = [0, 1, 0], sizes = [8, 1, 12], strides = [1, 1, 1]} : vector<8x8x12xf32> to vector<8x1x12xf32>
    %29 = vector.extract_strided_slice %2 {offsets = [1, 0, 0], sizes = [1, 4, 12], strides = [1, 1, 1]} : vector<8x4x12xf32> to vector<1x4x12xf32>
    %30 = vector.extract_strided_slice %3 {offsets = [1, 0, 0], sizes = [1, 4, 12], strides = [1, 1, 1]} : vector<8x4x12xf32> to vector<1x4x12xf32>
    %31 = vector.broadcast %27 : vector<8x1x12xf32> to vector<8x4x12xf32>
    %32 = vector.broadcast %29 : vector<1x4x12xf32> to vector<8x4x12xf32>
    %33 = arith.mulf %31, %32 : vector<8x4x12xf32>
    %34 = arith.addf %18, %33 : vector<8x4x12xf32>
    %35 = vector.broadcast %28 : vector<8x1x12xf32> to vector<8x4x12xf32>
    %36 = vector.broadcast %30 : vector<1x4x12xf32> to vector<8x4x12xf32>
    %37 = arith.mulf %35, %36 : vector<8x4x12xf32>
    %38 = arith.subf %34, %37 : vector<8x4x12xf32>
    %39 = vector.broadcast %27 : vector<8x1x12xf32> to vector<8x4x12xf32>
    %40 = vector.broadcast %30 : vector<1x4x12xf32> to vector<8x4x12xf32>
    %41 = arith.mulf %39, %40 : vector<8x4x12xf32>
    %42 = arith.addf %26, %41 : vector<8x4x12xf32>
    %43 = vector.broadcast %28 : vector<8x1x12xf32> to vector<8x4x12xf32>
    %44 = vector.broadcast %29 : vector<1x4x12xf32> to vector<8x4x12xf32>
    %45 = arith.mulf %43, %44 : vector<8x4x12xf32>
    %46 = arith.addf %42, %45 : vector<8x4x12xf32>
    %47 = vector.extract_strided_slice %0 {offsets = [0, 2, 0], sizes = [8, 1, 12], strides = [1, 1, 1]} : vector<8x8x12xf32> to vector<8x1x12xf32>
    %48 = vector.extract_strided_slice %1 {offsets = [0, 2, 0], sizes = [8, 1, 12], strides = [1, 1, 1]} : vector<8x8x12xf32> to vector<8x1x12xf32>
    %49 = vector.extract_strided_slice %2 {offsets = [2, 0, 0], sizes = [1, 4, 12], strides = [1, 1, 1]} : vector<8x4x12xf32> to vector<1x4x12xf32>
    %50 = vector.extract_strided_slice %3 {offsets = [2, 0, 0], sizes = [1, 4, 12], strides = [1, 1, 1]} : vector<8x4x12xf32> to vector<1x4x12xf32>
    %51 = vector.broadcast %47 : vector<8x1x12xf32> to vector<8x4x12xf32>
    %52 = vector.broadcast %49 : vector<1x4x12xf32> to vector<8x4x12xf32>
    %53 = arith.mulf %51, %52 : vector<8x4x12xf32>
    %54 = arith.addf %38, %53 : vector<8x4x12xf32>
    %55 = vector.broadcast %48 : vector<8x1x12xf32> to vector<8x4x12xf32>
    %56 = vector.broadcast %50 : vector<1x4x12xf32> to vector<8x4x12xf32>
    %57 = arith.mulf %55, %56 : vector<8x4x12xf32>
    %58 = arith.subf %54, %57 : vector<8x4x12xf32>
    %59 = vector.broadcast %47 : vector<8x1x12xf32> to vector<8x4x12xf32>
    %60 = vector.broadcast %50 : vector<1x4x12xf32> to vector<8x4x12xf32>
    %61 = arith.mulf %59, %60 : vector<8x4x12xf32>
    %62 = arith.addf %46, %61 : vector<8x4x12xf32>
    %63 = vector.broadcast %48 : vector<8x1x12xf32> to vector<8x4x12xf32>
    %64 = vector.broadcast %49 : vector<1x4x12xf32> to vector<8x4x12xf32>
    %65 = arith.mulf %63, %64 : vector<8x4x12xf32>
    %66 = arith.addf %62, %65 : vector<8x4x12xf32>
    %67 = vector.extract_strided_slice %0 {offsets = [0, 3, 0], sizes = [8, 1, 12], strides = [1, 1, 1]} : vector<8x8x12xf32> to vector<8x1x12xf32>
    %68 = vector.extract_strided_slice %1 {offsets = [0, 3, 0], sizes = [8, 1, 12], strides = [1, 1, 1]} : vector<8x8x12xf32> to vector<8x1x12xf32>
    %69 = vector.extract_strided_slice %2 {offsets = [3, 0, 0], sizes = [1, 4, 12], strides = [1, 1, 1]} : vector<8x4x12xf32> to vector<1x4x12xf32>
    %70 = vector.extract_strided_slice %3 {offsets = [3, 0, 0], sizes = [1, 4, 12], strides = [1, 1, 1]} : vector<8x4x12xf32> to vector<1x4x12xf32>
    %71 = vector.broadcast %67 : vector<8x1x12xf32> to vector<8x4x12xf32>
    %72 = vector.broadcast %69 : vector<1x4x12xf32> to vector<8x4x12xf32>
    %73 = arith.mulf %71, %72 : vector<8x4x12xf32>
    %74 = arith.addf %58, %73 : vector<8x4x12xf32>
    %75 = vector.broadcast %68 : vector<8x1x12xf32> to vector<8x4x12xf32>
    %76 = vector.broadcast %70 : vector<1x4x12xf32> to vector<8x4x12xf32>
    %77 = arith.mulf %75, %76 : vector<8x4x12xf32>
    %78 = arith.subf %74, %77 : vector<8x4x12xf32>
    %79 = vector.broadcast %67 : vector<8x1x12xf32> to vector<8x4x12xf32>
    %80 = vector.broadcast %70 : vector<1x4x12xf32> to vector<8x4x12xf32>
    %81 = arith.mulf %79, %80 : vector<8x4x12xf32>
    %82 = arith.addf %66, %81 : vector<8x4x12xf32>
    %83 = vector.broadcast %68 : vector<8x1x12xf32> to vector<8x4x12xf32>
    %84 = vector.broadcast %69 : vector<1x4x12xf32> to vector<8x4x12xf32>
    %85 = arith.mulf %83, %84 : vector<8x4x12xf32>
    %86 = arith.addf %82, %85 : vector<8x4x12xf32>
    %87 = vector.extract_strided_slice %0 {offsets = [0, 4, 0], sizes = [8, 1, 12], strides = [1, 1, 1]} : vector<8x8x12xf32> to vector<8x1x12xf32>
    %88 = vector.extract_strided_slice %1 {offsets = [0, 4, 0], sizes = [8, 1, 12], strides = [1, 1, 1]} : vector<8x8x12xf32> to vector<8x1x12xf32>
    %89 = vector.extract_strided_slice %2 {offsets = [4, 0, 0], sizes = [1, 4, 12], strides = [1, 1, 1]} : vector<8x4x12xf32> to vector<1x4x12xf32>
    %90 = vector.extract_strided_slice %3 {offsets = [4, 0, 0], sizes = [1, 4, 12], strides = [1, 1, 1]} : vector<8x4x12xf32> to vector<1x4x12xf32>
    %91 = vector.broadcast %87 : vector<8x1x12xf32> to vector<8x4x12xf32>
    %92 = vector.broadcast %89 : vector<1x4x12xf32> to vector<8x4x12xf32>
    %93 = arith.mulf %91, %92 : vector<8x4x12xf32>
    %94 = arith.addf %78, %93 : vector<8x4x12xf32>
    %95 = vector.broadcast %88 : vector<8x1x12xf32> to vector<8x4x12xf32>
    %96 = vector.broadcast %90 : vector<1x4x12xf32> to vector<8x4x12xf32>
    %97 = arith.mulf %95, %96 : vector<8x4x12xf32>
    %98 = arith.subf %94, %97 : vector<8x4x12xf32>
    %99 = vector.broadcast %87 : vector<8x1x12xf32> to vector<8x4x12xf32>
    %100 = vector.broadcast %90 : vector<1x4x12xf32> to vector<8x4x12xf32>
    %101 = arith.mulf %99, %100 : vector<8x4x12xf32>
    %102 = arith.addf %86, %101 : vector<8x4x12xf32>
    %103 = vector.broadcast %88 : vector<8x1x12xf32> to vector<8x4x12xf32>
    %104 = vector.broadcast %89 : vector<1x4x12xf32> to vector<8x4x12xf32>
    %105 = arith.mulf %103, %104 : vector<8x4x12xf32>
    %106 = arith.addf %102, %105 : vector<8x4x12xf32>
    %107 = vector.extract_strided_slice %0 {offsets = [0, 5, 0], sizes = [8, 1, 12], strides = [1, 1, 1]} : vector<8x8x12xf32> to vector<8x1x12xf32>
    %108 = vector.extract_strided_slice %1 {offsets = [0, 5, 0], sizes = [8, 1, 12], strides = [1, 1, 1]} : vector<8x8x12xf32> to vector<8x1x12xf32>
    %109 = vector.extract_strided_slice %2 {offsets = [5, 0, 0], sizes = [1, 4, 12], strides = [1, 1, 1]} : vector<8x4x12xf32> to vector<1x4x12xf32>
    %110 = vector.extract_strided_slice %3 {offsets = [5, 0, 0], sizes = [1, 4, 12], strides = [1, 1, 1]} : vector<8x4x12xf32> to vector<1x4x12xf32>
    %111 = vector.broadcast %107 : vector<8x1x12xf32> to vector<8x4x12xf32>
    %112 = vector.broadcast %109 : vector<1x4x12xf32> to vector<8x4x12xf32>
    %113 = arith.mulf %111, %112 : vector<8x4x12xf32>
    %114 = arith.addf %98, %113 : vector<8x4x12xf32>
    %115 = vector.broadcast %108 : vector<8x1x12xf32> to vector<8x4x12xf32>
    %116 = vector.broadcast %110 : vector<1x4x12xf32> to vector<8x4x12xf32>
    %117 = arith.mulf %115, %116 : vector<8x4x12xf32>
    %118 = arith.subf %114, %117 : vector<8x4x12xf32>
    %119 = vector.broadcast %107 : vector<8x1x12xf32> to vector<8x4x12xf32>
    %120 = vector.broadcast %110 : vector<1x4x12xf32> to vector<8x4x12xf32>
    %121 = arith.mulf %119, %120 : vector<8x4x12xf32>
    %122 = arith.addf %106, %121 : vector<8x4x12xf32>
    %123 = vector.broadcast %108 : vector<8x1x12xf32> to vector<8x4x12xf32>
    %124 = vector.broadcast %109 : vector<1x4x12xf32> to vector<8x4x12xf32>
    %125 = arith.mulf %123, %124 : vector<8x4x12xf32>
    %126 = arith.addf %122, %125 : vector<8x4x12xf32>
    %127 = vector.extract_strided_slice %0 {offsets = [0, 6, 0], sizes = [8, 1, 12], strides = [1, 1, 1]} : vector<8x8x12xf32> to vector<8x1x12xf32>
    %128 = vector.extract_strided_slice %1 {offsets = [0, 6, 0], sizes = [8, 1, 12], strides = [1, 1, 1]} : vector<8x8x12xf32> to vector<8x1x12xf32>
    %129 = vector.extract_strided_slice %2 {offsets = [6, 0, 0], sizes = [1, 4, 12], strides = [1, 1, 1]} : vector<8x4x12xf32> to vector<1x4x12xf32>
    %130 = vector.extract_strided_slice %3 {offsets = [6, 0, 0], sizes = [1, 4, 12], strides = [1, 1, 1]} : vector<8x4x12xf32> to vector<1x4x12xf32>
    %131 = vector.broadcast %127 : vector<8x1x12xf32> to vector<8x4x12xf32>
    %132 = vector.broadcast %129 : vector<1x4x12xf32> to vector<8x4x12xf32>
    %133 = arith.mulf %131, %132 : vector<8x4x12xf32>
    %134 = arith.addf %118, %133 : vector<8x4x12xf32>
    %135 = vector.broadcast %128 : vector<8x1x12xf32> to vector<8x4x12xf32>
    %136 = vector.broadcast %130 : vector<1x4x12xf32> to vector<8x4x12xf32>
    %137 = arith.mulf %135, %136 : vector<8x4x12xf32>
    %138 = arith.subf %134, %137 : vector<8x4x12xf32>
    %139 = vector.broadcast %127 : vector<8x1x12xf32> to vector<8x4x12xf32>
    %140 = vector.broadcast %130 : vector<1x4x12xf32> to vector<8x4x12xf32>
    %141 = arith.mulf %139, %140 : vector<8x4x12xf32>
    %142 = arith.addf %126, %141 : vector<8x4x12xf32>
    %143 = vector.broadcast %128 : vector<8x1x12xf32> to vector<8x4x12xf32>
    %144 = vector.broadcast %129 : vector<1x4x12xf32> to vector<8x4x12xf32>
    %145 = arith.mulf %143, %144 : vector<8x4x12xf32>
    %146 = arith.addf %142, %145 : vector<8x4x12xf32>
    %147 = vector.extract_strided_slice %0 {offsets = [0, 7, 0], sizes = [8, 1, 12], strides = [1, 1, 1]} : vector<8x8x12xf32> to vector<8x1x12xf32>
    %148 = vector.extract_strided_slice %1 {offsets = [0, 7, 0], sizes = [8, 1, 12], strides = [1, 1, 1]} : vector<8x8x12xf32> to vector<8x1x12xf32>
    %149 = vector.extract_strided_slice %2 {offsets = [7, 0, 0], sizes = [1, 4, 12], strides = [1, 1, 1]} : vector<8x4x12xf32> to vector<1x4x12xf32>
    %150 = vector.extract_strided_slice %3 {offsets = [7, 0, 0], sizes = [1, 4, 12], strides = [1, 1, 1]} : vector<8x4x12xf32> to vector<1x4x12xf32>
    %151 = vector.broadcast %147 : vector<8x1x12xf32> to vector<8x4x12xf32>
    %152 = vector.broadcast %149 : vector<1x4x12xf32> to vector<8x4x12xf32>
    %153 = arith.mulf %151, %152 : vector<8x4x12xf32>
    %154 = arith.addf %138, %153 : vector<8x4x12xf32>
    %155 = vector.broadcast %148 : vector<8x1x12xf32> to vector<8x4x12xf32>
    %156 = vector.broadcast %150 : vector<1x4x12xf32> to vector<8x4x12xf32>
    %157 = arith.mulf %155, %156 : vector<8x4x12xf32>
    %158 = arith.subf %154, %157 : vector<8x4x12xf32>
    %159 = vector.broadcast %147 : vector<8x1x12xf32> to vector<8x4x12xf32>
    %160 = vector.broadcast %150 : vector<1x4x12xf32> to vector<8x4x12xf32>
    %161 = arith.mulf %159, %160 : vector<8x4x12xf32>
    %162 = arith.addf %146, %161 : vector<8x4x12xf32>
    %163 = vector.broadcast %148 : vector<8x1x12xf32> to vector<8x4x12xf32>
    %164 = vector.broadcast %149 : vector<1x4x12xf32> to vector<8x4x12xf32>
    %165 = arith.mulf %163, %164 : vector<8x4x12xf32>
    %166 = arith.addf %162, %165 : vector<8x4x12xf32>
    %cst_15 = arith.constant 0.000000e+00 : f32
    %167 = vector.broadcast %cst_15 : f32 to vector<8x8x12xf32>
    %cst_16 = arith.constant 0.000000e+00 : f32
    %168 = vector.broadcast %cst_16 : f32 to vector<8x8x12xf32>
    %169 = vector.extract_strided_slice %4 {offsets = [0, 0, 0], sizes = [1, 8, 1], strides = [1, 1, 1]} : vector<4x8x1xf32> to vector<1x8x1xf32>
    %170 = vector.extract_strided_slice %158 {offsets = [0, 0, 0], sizes = [8, 1, 12], strides = [1, 1, 1]} : vector<8x4x12xf32> to vector<8x1x12xf32>
    %171 = vector.broadcast %170 : vector<8x1x12xf32> to vector<8x8x12xf32>
    %172 = vector.broadcast %169 : vector<1x8x1xf32> to vector<8x8x12xf32>
    %173 = arith.mulf %171, %172 : vector<8x8x12xf32>
    %174 = arith.addf %167, %173 : vector<8x8x12xf32>
    %175 = vector.extract_strided_slice %166 {offsets = [0, 0, 0], sizes = [8, 1, 12], strides = [1, 1, 1]} : vector<8x4x12xf32> to vector<8x1x12xf32>
    %176 = vector.broadcast %175 : vector<8x1x12xf32> to vector<8x8x12xf32>
    %177 = vector.broadcast %169 : vector<1x8x1xf32> to vector<8x8x12xf32>
    %178 = arith.mulf %176, %177 : vector<8x8x12xf32>
    %179 = arith.addf %168, %178 : vector<8x8x12xf32>
    %180 = vector.extract_strided_slice %4 {offsets = [1, 0, 0], sizes = [1, 8, 1], strides = [1, 1, 1]} : vector<4x8x1xf32> to vector<1x8x1xf32>
    %181 = vector.extract_strided_slice %158 {offsets = [0, 1, 0], sizes = [8, 1, 12], strides = [1, 1, 1]} : vector<8x4x12xf32> to vector<8x1x12xf32>
    %182 = vector.broadcast %181 : vector<8x1x12xf32> to vector<8x8x12xf32>
    %183 = vector.broadcast %180 : vector<1x8x1xf32> to vector<8x8x12xf32>
    %184 = arith.mulf %182, %183 : vector<8x8x12xf32>
    %185 = arith.addf %174, %184 : vector<8x8x12xf32>
    %186 = vector.extract_strided_slice %166 {offsets = [0, 1, 0], sizes = [8, 1, 12], strides = [1, 1, 1]} : vector<8x4x12xf32> to vector<8x1x12xf32>
    %187 = vector.broadcast %186 : vector<8x1x12xf32> to vector<8x8x12xf32>
    %188 = vector.broadcast %180 : vector<1x8x1xf32> to vector<8x8x12xf32>
    %189 = arith.mulf %187, %188 : vector<8x8x12xf32>
    %190 = arith.addf %179, %189 : vector<8x8x12xf32>
    %191 = vector.extract_strided_slice %4 {offsets = [2, 0, 0], sizes = [1, 8, 1], strides = [1, 1, 1]} : vector<4x8x1xf32> to vector<1x8x1xf32>
    %192 = vector.extract_strided_slice %158 {offsets = [0, 2, 0], sizes = [8, 1, 12], strides = [1, 1, 1]} : vector<8x4x12xf32> to vector<8x1x12xf32>
    %193 = vector.broadcast %192 : vector<8x1x12xf32> to vector<8x8x12xf32>
    %194 = vector.broadcast %191 : vector<1x8x1xf32> to vector<8x8x12xf32>
    %195 = arith.mulf %193, %194 : vector<8x8x12xf32>
    %196 = arith.addf %185, %195 : vector<8x8x12xf32>
    %197 = vector.extract_strided_slice %166 {offsets = [0, 2, 0], sizes = [8, 1, 12], strides = [1, 1, 1]} : vector<8x4x12xf32> to vector<8x1x12xf32>
    %198 = vector.broadcast %197 : vector<8x1x12xf32> to vector<8x8x12xf32>
    %199 = vector.broadcast %191 : vector<1x8x1xf32> to vector<8x8x12xf32>
    %200 = arith.mulf %198, %199 : vector<8x8x12xf32>
    %201 = arith.addf %190, %200 : vector<8x8x12xf32>
    %202 = vector.extract_strided_slice %4 {offsets = [3, 0, 0], sizes = [1, 8, 1], strides = [1, 1, 1]} : vector<4x8x1xf32> to vector<1x8x1xf32>
    %203 = vector.extract_strided_slice %158 {offsets = [0, 3, 0], sizes = [8, 1, 12], strides = [1, 1, 1]} : vector<8x4x12xf32> to vector<8x1x12xf32>
    %204 = vector.broadcast %203 : vector<8x1x12xf32> to vector<8x8x12xf32>
    %205 = vector.broadcast %202 : vector<1x8x1xf32> to vector<8x8x12xf32>
    %206 = arith.mulf %204, %205 : vector<8x8x12xf32>
    %207 = arith.addf %196, %206 : vector<8x8x12xf32>
    %208 = vector.extract_strided_slice %166 {offsets = [0, 3, 0], sizes = [8, 1, 12], strides = [1, 1, 1]} : vector<8x4x12xf32> to vector<8x1x12xf32>
    %209 = vector.broadcast %208 : vector<8x1x12xf32> to vector<8x8x12xf32>
    %210 = vector.broadcast %202 : vector<1x8x1xf32> to vector<8x8x12xf32>
    %211 = arith.mulf %209, %210 : vector<8x8x12xf32>
    %212 = arith.addf %201, %211 : vector<8x8x12xf32>
    %c0_17 = arith.constant 0 : index
    %c0_18 = arith.constant 0 : index
    %c0_19 = arith.constant 0 : index
    %213 = vector.load %arg6[%c0_17, %c0_18, %c0_19] : memref<8x8x12xf32, #tpu.memory_space<vmem>>, vector<8x8x12xf32>
    tpu.vector_store %arg6[%c0_17, %c0_18, %c0_19], %207 {strides = array<i32>} : memref<8x8x12xf32, #tpu.memory_space<vmem>>, vector<8x8x12xf32>,
    %c0_20 = arith.constant 0 : index
    %c0_21 = arith.constant 0 : index
    %c0_22 = arith.constant 0 : index
    %214 = vector.load %arg7[%c0_20, %c0_21, %c0_22] : memref<8x8x12xf32, #tpu.memory_space<vmem>>, vector<8x8x12xf32>
    tpu.vector_store %arg7[%c0_20, %c0_21, %c0_22], %212 {strides = array<i32>} : memref<8x8x12xf32, #tpu.memory_space<vmem>>, vector<8x8x12xf32>,
    return
  }
  func.func @transform_0(%arg0: i32) -> (i32, i32, i32) {
    %c0_i32 = arith.constant 0 : i32
    %c0_i32_0 = arith.constant 0 : i32
    %c0_i32_1 = arith.constant 0 : i32
    return %c0_i32, %c0_i32_0, %arg0 : i32, i32, i32
  }
  func.func @transform_1(%arg0: i32) -> (i32, i32, i32) {
    %c0_i32 = arith.constant 0 : i32
    %c0_i32_0 = arith.constant 0 : i32
    %c0_i32_1 = arith.constant 0 : i32
    return %c0_i32, %c0_i32_0, %arg0 : i32, i32, i32
  }
  func.func @transform_2(%arg0: i32) -> (i32, i32, i32) {
    %c0_i32 = arith.constant 0 : i32
    %c0_i32_0 = arith.constant 0 : i32
    %c0_i32_1 = arith.constant 0 : i32
    return %c0_i32, %c0_i32_0, %arg0 : i32, i32, i32
  }
  func.func @transform_3(%arg0: i32) -> (i32, i32, i32) {
    %c0_i32 = arith.constant 0 : i32
    %c0_i32_0 = arith.constant 0 : i32
    %c0_i32_1 = arith.constant 0 : i32
    return %c0_i32, %c0_i32_0, %arg0 : i32, i32, i32
  }
  func.func @transform_4(%arg0: i32) -> (i32, i32, i32) {
    %c0_i32 = arith.constant 0 : i32
    %c0_i32_0 = arith.constant 0 : i32
    %c0_i32_1 = arith.constant 0 : i32
    %c0_i32_2 = arith.constant 0 : i32
    return %c0_i32, %c0_i32_0, %c0_i32_1 : i32, i32, i32
  }
  func.func @transform_5(%arg0: i32) -> (i32, i32, i32) {
    %c0_i32 = arith.constant 0 : i32
    %c0_i32_0 = arith.constant 0 : i32
    %c0_i32_1 = arith.constant 0 : i32
    return %c0_i32, %c0_i32_0, %arg0 : i32, i32, i32
  }
  func.func @transform_6(%arg0: i32) -> (i32, i32, i32) {
    %c0_i32 = arith.constant 0 : i32
    %c0_i32_0 = arith.constant 0 : i32
    %c0_i32_1 = arith.constant 0 : i32
    return %c0_i32, %c0_i32_0, %arg0 : i32, i32, i32
  }
}

</mosaic_0001>

<llo_original>
// kernel: t_spectral_conv.1
$region0: #{t_spectral_conv.1}
  #allocation0 [shape = 'u32[]', space=smem, size = 0x4, offset = 0x4, fixed_abs, tag = 'smem constant byte address 0x4 - core index']
  #allocation1 [shape = 'u32[72,128]{1,0:T(1,128)}', space=vmem, size = 0x9000, scoped, tag = 'internal scratch']
  %s0 = inlined_call_operand.vmem [shape: f32[8,8,12], index: 0, kind: input, shape index: {}]
  %s1 = inlined_call_operand.vmem [shape: f32[8,8,12], index: 1, kind: input, shape index: {}]
  %s2 = inlined_call_operand.vmem [shape: f32[8,4,12], index: 2, kind: input, shape index: {}]
  %s3 = inlined_call_operand.vmem [shape: f32[8,4,12], index: 3, kind: input, shape index: {}]
  %s4 = inlined_call_operand.vmem [shape: f32[4,8,1], index: 4, kind: input, shape index: {}]
  %s5 = inlined_call_operand.vmem [shape: f32[8,8,12], index: 5, kind: output, shape index: {0}]
  %s6 = inlined_call_operand.vmem [shape: f32[8,8,12], index: 6, kind: output, shape index: {1}]
  %7 = xla_tuple %s5, %s6
  %s8 = sld [smem:[#allocation0]]
  $region38: #{t_spectral_conv.1} parent=0
    _
  %s10 = ssub.s32 1, %s8
  %s11 = scalar_select 0, %s10, %s8
  // Predicated region
  $region2: #{t_spectral_conv.1} parent=0 // pred_check
    _
  $region3: #{t_spectral_conv.1} parent=0 // pred_check_branch
    %13 = sbr.rel (0) target = $region5
  $region4: #{t_spectral_conv.1} parent=0 // pred_region
    _
  $region5: #{t_spectral_conv.1} parent=0 // pred_fallthru
    _
  // Predicated region
  $region6: #{t_spectral_conv.1} parent=0 // pred_check
    _
  $region7: #{t_spectral_conv.1} parent=0 // pred_check_branch
    %15 = sbr.rel (0) target = $region9
  $region8: #{t_spectral_conv.1} parent=0 // pred_region
    _
  $region9: #{t_spectral_conv.1} parent=0 // pred_fallthru
    _
  // Predicated region
  $region10: #{t_spectral_conv.1} parent=0 // pred_check
    _
  $region11: #{t_spectral_conv.1} parent=0 // pred_check_branch
    %17 = sbr.rel (0) target = $region13
  $region12: #{t_spectral_conv.1} parent=0 // pred_region
    _
  $region13: #{t_spectral_conv.1} parent=0 // pred_fallthru
    _
  // Predicated region
  $region14: #{t_spectral_conv.1} parent=0 // pred_check
    _
  $region15: #{t_spectral_conv.1} parent=0 // pred_check_branch
    %19 = sbr.rel (0) target = $region17
  $region16: #{t_spectral_conv.1} parent=0 // pred_region
    _
  $region17: #{t_spectral_conv.1} parent=0 // pred_fallthru
    _
  // Predicated region
  $region18: #{t_spectral_conv.1} parent=0 // pred_check
    _
  $region19: #{t_spectral_conv.1} parent=0 // pred_check_branch
    %21 = sbr.rel (0) target = $region21
  $region20: #{t_spectral_conv.1} parent=0 // pred_region
    _
  $region21: #{t_spectral_conv.1} parent=0 // pred_fallthru
    _
  %v22 = vld [vmem:[%s0] sm:$0xff]
  %v23 = vld [vmem:[%s0 + $0x8] sm:$0xff]
  %v24 = vld [vmem:[%s0 + $0x10] sm:$0xff]
  %v25 = vld [vmem:[%s0 + $0x18] sm:$0xff]
  %v26 = vld [vmem:[%s0 + $0x20] sm:$0xff]
  %v27 = vld [vmem:[%s0 + $0x28] sm:$0xff]
  %v28 = vld [vmem:[%s0 + $0x30] sm:$0xff]
  %v29 = vld [vmem:[%s0 + $0x38] sm:$0xff]
  %v30 = vld [vmem:[%s1] sm:$0xff]
  %v31 = vld [vmem:[%s1 + $0x8] sm:$0xff]
  %v32 = vld [vmem:[%s1 + $0x10] sm:$0xff]
  %v33 = vld [vmem:[%s1 + $0x18] sm:$0xff]
  %v34 = vld [vmem:[%s1 + $0x20] sm:$0xff]
  %v35 = vld [vmem:[%s1 + $0x28] sm:$0xff]
  %v36 = vld [vmem:[%s1 + $0x30] sm:$0xff]
  %v37 = vld [vmem:[%s1 + $0x38] sm:$0xff]
  %v38 = vld [vmem:[%s2] sm:$0xf]
  %v39 = vld [vmem:[%s2 + $0x4] sm:$0xf]
  %v40 = vld [vmem:[%s2 + $0x8] sm:$0xf]
  %v41 = vld [vmem:[%s2 + $0xc] sm:$0xf]
  %v42 = vld [vmem:[%s2 + $0x10] sm:$0xf]
  %v43 = vld [vmem:[%s2 + $0x14] sm:$0xf]
  %v44 = vld [vmem:[%s2 + $0x18] sm:$0xf]
  %v45 = vld [vmem:[%s2 + $0x1c] sm:$0xf]
  %v46 = vld [vmem:[%s3] sm:$0xf]
  %v47 = vld [vmem:[%s3 + $0x4] sm:$0xf]
  %v48 = vld [vmem:[%s3 + $0x8] sm:$0xf]
  %v49 = vld [vmem:[%s3 + $0xc] sm:$0xf]
  %v50 = vld [vmem:[%s3 + $0x10] sm:$0xf]
  %v51 = vld [vmem:[%s3 + $0x14] sm:$0xf]
  %v52 = vld [vmem:[%s3 + $0x18] sm:$0xf]
  %v53 = vld [vmem:[%s3 + $0x1c] sm:$0xf]
  %v54 = vld [vmem:[%s4] sm:$0xff]
  %v55 = vld [vmem:[%s4 + $0x8] sm:$0xff]
  %v56 = vld [vmem:[%s4 + $0x10] sm:$0xff]
  %v57 = vld [vmem:[%s4 + $0x18] sm:$0xff]
  %v58 = vperm.slane %v22, 0
  %v59 = vperm.slane %v23, 0
  %v60 = vperm.slane %v24, 0
  %v61 = vperm.slane %v25, 0
  %v62 = vperm.slane %v26, 0
  %v63 = vperm.slane %v27, 0
  %v64 = vperm.slane %v28, 0
  %v65 = vperm.slane %v29, 0
  %v66 = vmul.f32 %v58, %v38
  %v67 = vmul.f32 %v59, %v38
  %v68 = vmul.f32 %v60, %v38
  %v69 = vmul.f32 %v61, %v38
  %v70 = vmul.f32 %v62, %v38
  %v71 = vmul.f32 %v63, %v38
  %v72 = vmul.f32 %v64, %v38
  %v73 = vmul.f32 %v65, %v38
  %v74 = vadd.f32 %v66, 0.0
  %v75 = vadd.f32 %v67, 0.0
  %v76 = vadd.f32 %v68, 0.0
  %v77 = vadd.f32 %v69, 0.0
  %v78 = vadd.f32 %v70, 0.0
  %v79 = vadd.f32 %v71, 0.0
  %v80 = vadd.f32 %v72, 0.0
  %v81 = vadd.f32 %v73, 0.0
  %v82 = vperm.slane %v30, 0
  %v83 = vperm.slane %v31, 0
  %v84 = vperm.slane %v32, 0
  %v85 = vperm.slane %v33, 0
  %v86 = vperm.slane %v34, 0
  %v87 = vperm.slane %v35, 0
  %v88 = vperm.slane %v36, 0
  %v89 = vperm.slane %v37, 0
  %v90 = vmul.f32 %v82, %v46
  %v91 = vmul.f32 %v83, %v46
  %v92 = vmul.f32 %v84, %v46
  %v93 = vmul.f32 %v85, %v46
  %v94 = vmul.f32 %v86, %v46
  %v95 = vmul.f32 %v87, %v46
  %v96 = vmul.f32 %v88, %v46
  %v97 = vmul.f32 %v89, %v46
  %v98 = vsub.f32 %v74, %v90
  %v99 = vsub.f32 %v75, %v91
  %v100 = vsub.f32 %v76, %v92
  %v101 = vsub.f32 %v77, %v93
  %v102 = vsub.f32 %v78, %v94
  %v103 = vsub.f32 %v79, %v95
  %v104 = vsub.f32 %v80, %v96
  %v105 = vsub.f32 %v81, %v97
  %v106 = vmul.f32 %v58, %v46
  %v107 = vmul.f32 %v59, %v46
  %v108 = vmul.f32 %v60, %v46
  %v109 = vmul.f32 %v61, %v46
  %v110 = vmul.f32 %v62, %v46
  %v111 = vmul.f32 %v63, %v46
  %v112 = vmul.f32 %v64, %v46
  %v113 = vmul.f32 %v65, %v46
  %v114 = vadd.f32 %v106, 0.0
  %v115 = vadd.f32 %v107, 0.0
  %v116 = vadd.f32 %v108, 0.0
  %v117 = vadd.f32 %v109, 0.0
  %v118 = vadd.f32 %v110, 0.0
  %v119 = vadd.f32 %v111, 0.0
  %v120 = vadd.f32 %v112, 0.0
  %v121 = vadd.f32 %v113, 0.0
  %v122 = vmul.f32 %v82, %v38
  %v123 = vmul.f32 %v83, %v38
  %v124 = vmul.f32 %v84, %v38
  %v125 = vmul.f32 %v85, %v38
  %v126 = vmul.f32 %v86, %v38
  %v127 = vmul.f32 %v87, %v38
  %v128 = vmul.f32 %v88, %v38
  %v129 = vmul.f32 %v89, %v38
  %v130 = vadd.f32 %v114, %v122
  %v131 = vadd.f32 %v115, %v123
  %v132 = vadd.f32 %v116, %v124
  %v133 = vadd.f32 %v117, %v125
  %v134 = vadd.f32 %v118, %v126
  %v135 = vadd.f32 %v119, %v127
  %v136 = vadd.f32 %v120, %v128
  %v137 = vadd.f32 %v121, %v129
  %v138 = vperm.slane %v22, 1
  %v139 = vperm.slane %v23, 1
  %v140 = vperm.slane %v24, 1
  %v141 = vperm.slane %v25, 1
  %v142 = vperm.slane %v26, 1
  %v143 = vperm.slane %v27, 1
  %v144 = vperm.slane %v28, 1
  %v145 = vperm.slane %v29, 1
  %v146 = vmul.f32 %v138, %v39
  %v147 = vmul.f32 %v139, %v39
  %v148 = vmul.f32 %v140, %v39
  %v149 = vmul.f32 %v141, %v39
  %v150 = vmul.f32 %v142, %v39
  %v151 = vmul.f32 %v143, %v39
  %v152 = vmul.f32 %v144, %v39
  %v153 = vmul.f32 %v145, %v39
  %v154 = vadd.f32 %v98, %v146
  %v155 = vadd.f32 %v99, %v147
  %v156 = vadd.f32 %v100, %v148
  %v157 = vadd.f32 %v101, %v149
  %v158 = vadd.f32 %v102, %v150
  %v159 = vadd.f32 %v103, %v151
  %v160 = vadd.f32 %v104, %v152
  %v161 = vadd.f32 %v105, %v153
  %v162 = vperm.slane %v30, 1
  %v163 = vperm.slane %v31, 1
  %v164 = vperm.slane %v32, 1
  %v165 = vperm.slane %v33, 1
  %v166 = vperm.slane %v34, 1
  %v167 = vperm.slane %v35, 1
  %v168 = vperm.slane %v36, 1
  %v169 = vperm.slane %v37, 1
  %v170 = vmul.f32 %v162, %v47
  %v171 = vmul.f32 %v163, %v47
  %v172 = vmul.f32 %v164, %v47
  %v173 = vmul.f32 %v165, %v47
  %v174 = vmul.f32 %v166, %v47
  %v175 = vmul.f32 %v167, %v47
  %v176 = vmul.f32 %v168, %v47
  %v177 = vmul.f32 %v169, %v47
  %v178 = vsub.f32 %v154, %v170
  %v179 = vsub.f32 %v155, %v171
  %v180 = vsub.f32 %v156, %v172
  %v181 = vsub.f32 %v157, %v173
  %v182 = vsub.f32 %v158, %v174
  %v183 = vsub.f32 %v159, %v175
  %v184 = vsub.f32 %v160, %v176
  %v185 = vsub.f32 %v161, %v177
  %v186 = vmul.f32 %v138, %v47
  %v187 = vmul.f32 %v139, %v47
  %v188 = vmul.f32 %v140, %v47
  %v189 = vmul.f32 %v141, %v47
  %v190 = vmul.f32 %v142, %v47
  %v191 = vmul.f32 %v143, %v47
  %v192 = vmul.f32 %v144, %v47
  %v193 = vmul.f32 %v145, %v47
  %v194 = vadd.f32 %v130, %v186
  %v195 = vadd.f32 %v131, %v187
  %v196 = vadd.f32 %v132, %v188
  %v197 = vadd.f32 %v133, %v189
  %v198 = vadd.f32 %v134, %v190
  %v199 = vadd.f32 %v135, %v191
  %v200 = vadd.f32 %v136, %v192
  %v201 = vadd.f32 %v137, %v193
  %v202 = vmul.f32 %v162, %v39
  %v203 = vmul.f32 %v163, %v39
  %v204 = vmul.f32 %v164, %v39
  %v205 = vmul.f32 %v165, %v39
  %v206 = vmul.f32 %v166, %v39
  %v207 = vmul.f32 %v167, %v39
  %v208 = vmul.f32 %v168, %v39
  %v209 = vmul.f32 %v169, %v39
  %v210 = vadd.f32 %v194, %v202
  %v211 = vadd.f32 %v195, %v203
  %v212 = vadd.f32 %v196, %v204
  %v213 = vadd.f32 %v197, %v205
  %v214 = vadd.f32 %v198, %v206
  %v215 = vadd.f32 %v199, %v207
  %v216 = vadd.f32 %v200, %v208
  %v217 = vadd.f32 %v201, %v209
  %v218 = vperm.slane %v22, 2
  %v219 = vperm.slane %v23, 2
  %v220 = vperm.slane %v24, 2
  %v221 = vperm.slane %v25, 2
  %v222 = vperm.slane %v26, 2
  %v223 = vperm.slane %v27, 2
  %v224 = vperm.slane %v28, 2
  %v225 = vperm.slane %v29, 2
  %v226 = vmul.f32 %v218, %v40
  %v227 = vmul.f32 %v219, %v40
  %v228 = vmul.f32 %v220, %v40
  %v229 = vmul.f32 %v221, %v40
  %v230 = vmul.f32 %v222, %v40
  %v231 = vmul.f32 %v223, %v40
  %v232 = vmul.f32 %v224, %v40
  %v233 = vmul.f32 %v225, %v40
  %v234 = vadd.f32 %v178, %v226
  %v235 = vadd.f32 %v179, %v227
  %v236 = vadd.f32 %v180, %v228
  %v237 = vadd.f32 %v181, %v229
  %v238 = vadd.f32 %v182, %v230
  %v239 = vadd.f32 %v183, %v231
  %v240 = vadd.f32 %v184, %v232
  %v241 = vadd.f32 %v185, %v233
  %v242 = vperm.slane %v30, 2
  %v243 = vperm.slane %v31, 2
  %v244 = vperm.slane %v32, 2
  %v245 = vperm.slane %v33, 2
  %v246 = vperm.slane %v34, 2
  %v247 = vperm.slane %v35, 2
  %v248 = vperm.slane %v36, 2
  %v249 = vperm.slane %v37, 2
  %v250 = vmul.f32 %v242, %v48
  %v251 = vmul.f32 %v243, %v48
  %v252 = vmul.f32 %v244, %v48
  %v253 = vmul.f32 %v245, %v48
  %v254 = vmul.f32 %v246, %v48
  %v255 = vmul.f32 %v247, %v48
  %v256 = vmul.f32 %v248, %v48
  %v257 = vmul.f32 %v249, %v48
  %v258 = vsub.f32 %v234, %v250
  %v259 = vsub.f32 %v235, %v251
  %v260 = vsub.f32 %v236, %v252
  %v261 = vsub.f32 %v237, %v253
  %v262 = vsub.f32 %v238, %v254
  %v263 = vsub.f32 %v239, %v255
  %v264 = vsub.f32 %v240, %v256
  %v265 = vsub.f32 %v241, %v257
  %v266 = vmul.f32 %v218, %v48
  %v267 = vmul.f32 %v219, %v48
  %v268 = vmul.f32 %v220, %v48
  %v269 = vmul.f32 %v221, %v48
  %v270 = vmul.f32 %v222, %v48
  %v271 = vmul.f32 %v223, %v48
  %v272 = vmul.f32 %v224, %v48
  %v273 = vmul.f32 %v225, %v48
  %v274 = vadd.f32 %v210, %v266
  %v275 = vadd.f32 %v211, %v267
  %v276 = vadd.f32 %v212, %v268
  %v277 = vadd.f32 %v213, %v269
  %v278 = vadd.f32 %v214, %v270
  %v279 = vadd.f32 %v215, %v271
  %v280 = vadd.f32 %v216, %v272
  %v281 = vadd.f32 %v217, %v273
  %v282 = vmul.f32 %v242, %v40
  %v283 = vmul.f32 %v243, %v40
  %v284 = vmul.f32 %v244, %v40
  %v285 = vmul.f32 %v245, %v40
  %v286 = vmul.f32 %v246, %v40
  %v287 = vmul.f32 %v247, %v40
  %v288 = vmul.f32 %v248, %v40
  %v289 = vmul.f32 %v249, %v40
  %v290 = vadd.f32 %v274, %v282
  %v291 = vadd.f32 %v275, %v283
  %v292 = vadd.f32 %v276, %v284
  %v293 = vadd.f32 %v277, %v285
  %v294 = vadd.f32 %v278, %v286
  %v295 = vadd.f32 %v279, %v287
  %v296 = vadd.f32 %v280, %v288
  %v297 = vadd.f32 %v281, %v289
  %v298 = vperm.slane %v22, 3
  %v299 = vperm.slane %v23, 3
  %v300 = vperm.slane %v24, 3
  %v301 = vperm.slane %v25, 3
  %v302 = vperm.slane %v26, 3
  %v303 = vperm.slane %v27, 3
  %v304 = vperm.slane %v28, 3
  %v305 = vperm.slane %v29, 3
  %v306 = vmul.f32 %v298, %v41
  %v307 = vmul.f32 %v299, %v41
  %v308 = vmul.f32 %v300, %v41
  %v309 = vmul.f32 %v301, %v41
  %v310 = vmul.f32 %v302, %v41
  %v311 = vmul.f32 %v303, %v41
  %v312 = vmul.f32 %v304, %v41
  %v313 = vmul.f32 %v305, %v41
  %v314 = vadd.f32 %v258, %v306
  %v315 = vadd.f32 %v259, %v307
  %v316 = vadd.f32 %v260, %v308
  %v317 = vadd.f32 %v261, %v309
  %v318 = vadd.f32 %v262, %v310
  %v319 = vadd.f32 %v263, %v311
  %v320 = vadd.f32 %v264, %v312
  %v321 = vadd.f32 %v265, %v313
  %v322 = vperm.slane %v30, 3
  %v323 = vperm.slane %v31, 3
  %v324 = vperm.slane %v32, 3
  %v325 = vperm.slane %v33, 3
  %v326 = vperm.slane %v34, 3
  %v327 = vperm.slane %v35, 3
  %v328 = vperm.slane %v36, 3
  %v329 = vperm.slane %v37, 3
  %v330 = vmul.f32 %v322, %v49
  %v331 = vmul.f32 %v323, %v49
  %v332 = vmul.f32 %v324, %v49
  %v333 = vmul.f32 %v325, %v49
  %v334 = vmul.f32 %v326, %v49
  %v335 = vmul.f32 %v327, %v49
  %v336 = vmul.f32 %v328, %v49
  %v337 = vmul.f32 %v329, %v49
  %v338 = vsub.f32 %v314, %v330
  %v339 = vsub.f32 %v315, %v331
  %v340 = vsub.f32 %v316, %v332
  %v341 = vsub.f32 %v317, %v333
  %v342 = vsub.f32 %v318, %v334
  %v343 = vsub.f32 %v319, %v335
  %v344 = vsub.f32 %v320, %v336
  %v345 = vsub.f32 %v321, %v337
  %v346 = vmul.f32 %v298, %v49
  %v347 = vmul.f32 %v299, %v49
  %v348 = vmul.f32 %v300, %v49
  %v349 = vmul.f32 %v301, %v49
  %v350 = vmul.f32 %v302, %v49
  %v351 = vmul.f32 %v303, %v49
  %v352 = vmul.f32 %v304, %v49
  %v353 = vmul.f32 %v305, %v49
  %v354 = vadd.f32 %v290, %v346
  %v355 = vadd.f32 %v291, %v347
  %v356 = vadd.f32 %v292, %v348
  %v357 = vadd.f32 %v293, %v349
  %v358 = vadd.f32 %v294, %v350
  %v359 = vadd.f32 %v295, %v351
  %v360 = vadd.f32 %v296, %v352
  %v361 = vadd.f32 %v297, %v353
  %v362 = vmul.f32 %v322, %v41
  %v363 = vmul.f32 %v323, %v41
  %v364 = vmul.f32 %v324, %v41
  %v365 = vmul.f32 %v325, %v41
  %v366 = vmul.f32 %v326, %v41
  %v367 = vmul.f32 %v327, %v41
  %v368 = vmul.f32 %v328, %v41
  %v369 = vmul.f32 %v329, %v41
  %v370 = vadd.f32 %v354, %v362
  %v371 = vadd.f32 %v355, %v363
  %v372 = vadd.f32 %v356, %v364
  %v373 = vadd.f32 %v357, %v365
  %v374 = vadd.f32 %v358, %v366
  %v375 = vadd.f32 %v359, %v367
  %v376 = vadd.f32 %v360, %v368
  %v377 = vadd.f32 %v361, %v369
  %v378 = vperm.slane %v22, 4
  %v379 = vperm.slane %v23, 4
  %v380 = vperm.slane %v24, 4
  %v381 = vperm.slane %v25, 4
  %v382 = vperm.slane %v26, 4
  %v383 = vperm.slane %v27, 4
  %v384 = vperm.slane %v28, 4
  %v385 = vperm.slane %v29, 4
  %v386 = vmul.f32 %v378, %v42
  %v387 = vmul.f32 %v379, %v42
  %v388 = vmul.f32 %v380, %v42
  %v389 = vmul.f32 %v381, %v42
  %v390 = vmul.f32 %v382, %v42
  %v391 = vmul.f32 %v383, %v42
  %v392 = vmul.f32 %v384, %v42
  %v393 = vmul.f32 %v385, %v42
  %v394 = vadd.f32 %v338, %v386
  %v395 = vadd.f32 %v339, %v387
  %v396 = vadd.f32 %v340, %v388
  %v397 = vadd.f32 %v341, %v389
  %v398 = vadd.f32 %v342, %v390
  %v399 = vadd.f32 %v343, %v391
  %v400 = vadd.f32 %v344, %v392
  %v401 = vadd.f32 %v345, %v393
  %v402 = vperm.slane %v30, 4
  %v403 = vperm.slane %v31, 4
  %v404 = vperm.slane %v32, 4
  %v405 = vperm.slane %v33, 4
  %v406 = vperm.slane %v34, 4
  %v407 = vperm.slane %v35, 4
  %v408 = vperm.slane %v36, 4
  %v409 = vperm.slane %v37, 4
  %v410 = vmul.f32 %v402, %v50
  %v411 = vmul.f32 %v403, %v50
  %v412 = vmul.f32 %v404, %v50
  %v413 = vmul.f32 %v405, %v50
  %v414 = vmul.f32 %v406, %v50
  %v415 = vmul.f32 %v407, %v50
  %v416 = vmul.f32 %v408, %v50
  %v417 = vmul.f32 %v409, %v50
  %v418 = vsub.f32 %v394, %v410
  %v419 = vsub.f32 %v395, %v411
  %v420 = vsub.f32 %v396, %v412
  %v421 = vsub.f32 %v397, %v413
  %v422 = vsub.f32 %v398, %v414
  %v423 = vsub.f32 %v399, %v415
  %v424 = vsub.f32 %v400, %v416
  %v425 = vsub.f32 %v401, %v417
  %v426 = vmul.f32 %v378, %v50
  %v427 = vmul.f32 %v379, %v50
  %v428 = vmul.f32 %v380, %v50
  %v429 = vmul.f32 %v381, %v50
  %v430 = vmul.f32 %v382, %v50
  %v431 = vmul.f32 %v383, %v50
  %v432 = vmul.f32 %v384, %v50
  %v433 = vmul.f32 %v385, %v50
  %v434 = vadd.f32 %v370, %v426
  %v435 = vadd.f32 %v371, %v427
  %v436 = vadd.f32 %v372, %v428
  %v437 = vadd.f32 %v373, %v429
  %v438 = vadd.f32 %v374, %v430
  %v439 = vadd.f32 %v375, %v431
  %v440 = vadd.f32 %v376, %v432
  %v441 = vadd.f32 %v377, %v433
  %v442 = vmul.f32 %v402, %v42
  %v443 = vmul.f32 %v403, %v42
  %v444 = vmul.f32 %v404, %v42
  %v445 = vmul.f32 %v405, %v42
  %v446 = vmul.f32 %v406, %v42
  %v447 = vmul.f32 %v407, %v42
  %v448 = vmul.f32 %v408, %v42
  %v449 = vmul.f32 %v409, %v42
  %v450 = vadd.f32 %v434, %v442
  %v451 = vadd.f32 %v435, %v443
  %v452 = vadd.f32 %v436, %v444
  %v453 = vadd.f32 %v437, %v445
  %v454 = vadd.f32 %v438, %v446
  %v455 = vadd.f32 %v439, %v447
  %v456 = vadd.f32 %v440, %v448
  %v457 = vadd.f32 %v441, %v449
  %v458 = vperm.slane %v22, 5
  %v459 = vperm.slane %v23, 5
  %v460 = vperm.slane %v24, 5
  %v461 = vperm.slane %v25, 5
  %v462 = vperm.slane %v26, 5
  %v463 = vperm.slane %v27, 5
  %v464 = vperm.slane %v28, 5
  %v465 = vperm.slane %v29, 5
  %v466 = vmul.f32 %v458, %v43
  %v467 = vmul.f32 %v459, %v43
  %v468 = vmul.f32 %v460, %v43
  %v469 = vmul.f32 %v461, %v43
  %v470 = vmul.f32 %v462, %v43
  %v471 = vmul.f32 %v463, %v43
  %v472 = vmul.f32 %v464, %v43
  %v473 = vmul.f32 %v465, %v43
  %v474 = vadd.f32 %v418, %v466
  %v475 = vadd.f32 %v419, %v467
  %v476 = vadd.f32 %v420, %v468
  %v477 = vadd.f32 %v421, %v469
  %v478 = vadd.f32 %v422, %v470
  %v479 = vadd.f32 %v423, %v471
  %v480 = vadd.f32 %v424, %v472
  %v481 = vadd.f32 %v425, %v473
  %v482 = vperm.slane %v30, 5
  %v483 = vperm.slane %v31, 5
  %v484 = vperm.slane %v32, 5
  %v485 = vperm.slane %v33, 5
  %v486 = vperm.slane %v34, 5
  %v487 = vperm.slane %v35, 5
  %v488 = vperm.slane %v36, 5
  %v489 = vperm.slane %v37, 5
  %v490 = vmul.f32 %v482, %v51
  %v491 = vmul.f32 %v483, %v51
  %v492 = vmul.f32 %v484, %v51
  %v493 = vmul.f32 %v485, %v51
  %v494 = vmul.f32 %v486, %v51
  %v495 = vmul.f32 %v487, %v51
  %v496 = vmul.f32 %v488, %v51
  %v497 = vmul.f32 %v489, %v51
  %v498 = vsub.f32 %v474, %v490
  %v499 = vsub.f32 %v475, %v491
  %v500 = vsub.f32 %v476, %v492
  %v501 = vsub.f32 %v477, %v493
  %v502 = vsub.f32 %v478, %v494
  %v503 = vsub.f32 %v479, %v495
  %v504 = vsub.f32 %v480, %v496
  %v505 = vsub.f32 %v481, %v497
  %v506 = vmul.f32 %v458, %v51
  %v507 = vmul.f32 %v459, %v51
  %v508 = vmul.f32 %v460, %v51
  %v509 = vmul.f32 %v461, %v51
  %v510 = vmul.f32 %v462, %v51
  %v511 = vmul.f32 %v463, %v51
  %v512 = vmul.f32 %v464, %v51
  %v513 = vmul.f32 %v465, %v51
  %v514 = vadd.f32 %v450, %v506
  %v515 = vadd.f32 %v451, %v507
  %v516 = vadd.f32 %v452, %v508
  %v517 = vadd.f32 %v453, %v509
  %v518 = vadd.f32 %v454, %v510
  %v519 = vadd.f32 %v455, %v511
  %v520 = vadd.f32 %v456, %v512
  %v521 = vadd.f32 %v457, %v513
  %v522 = vmul.f32 %v482, %v43
  %v523 = vmul.f32 %v483, %v43
  %v524 = vmul.f32 %v484, %v43
  %v525 = vmul.f32 %v485, %v43
  %v526 = vmul.f32 %v486, %v43
  %v527 = vmul.f32 %v487, %v43
  %v528 = vmul.f32 %v488, %v43
  %v529 = vmul.f32 %v489, %v43
  %v530 = vadd.f32 %v514, %v522
  %v531 = vadd.f32 %v515, %v523
  %v532 = vadd.f32 %v516, %v524
  %v533 = vadd.f32 %v517, %v525
  %v534 = vadd.f32 %v518, %v526
  %v535 = vadd.f32 %v519, %v527
  %v536 = vadd.f32 %v520, %v528
  %v537 = vadd.f32 %v521, %v529
  %v538 = vperm.slane %v22, 6
  %v539 = vperm.slane %v23, 6
  %v540 = vperm.slane %v24, 6
  %v541 = vperm.slane %v25, 6
  %v542 = vperm.slane %v26, 6
  %v543 = vperm.slane %v27, 6
  %v544 = vperm.slane %v28, 6
  %v545 = vperm.slane %v29, 6
  %v546 = vmul.f32 %v538, %v44
  %v547 = vmul.f32 %v539, %v44
  %v548 = vmul.f32 %v540, %v44
  %v549 = vmul.f32 %v541, %v44
  %v550 = vmul.f32 %v542, %v44
  %v551 = vmul.f32 %v543, %v44
  %v552 = vmul.f32 %v544, %v44
  %v553 = vmul.f32 %v545, %v44
  %v554 = vadd.f32 %v498, %v546
  %v555 = vadd.f32 %v499, %v547
  %v556 = vadd.f32 %v500, %v548
  %v557 = vadd.f32 %v501, %v549
  %v558 = vadd.f32 %v502, %v550
  %v559 = vadd.f32 %v503, %v551
  %v560 = vadd.f32 %v504, %v552
  %v561 = vadd.f32 %v505, %v553
  %v562 = vperm.slane %v30, 6
  %v563 = vperm.slane %v31, 6
  %v564 = vperm.slane %v32, 6
  %v565 = vperm.slane %v33, 6
  %v566 = vperm.slane %v34, 6
  %v567 = vperm.slane %v35, 6
  %v568 = vperm.slane %v36, 6
  %v569 = vperm.slane %v37, 6
  %v570 = vmul.f32 %v562, %v52
  %v571 = vmul.f32 %v563, %v52
  %v572 = vmul.f32 %v564, %v52
  %v573 = vmul.f32 %v565, %v52
  %v574 = vmul.f32 %v566, %v52
  %v575 = vmul.f32 %v567, %v52
  %v576 = vmul.f32 %v568, %v52
  %v577 = vmul.f32 %v569, %v52
  %v578 = vsub.f32 %v554, %v570
  %v579 = vsub.f32 %v555, %v571
  %v580 = vsub.f32 %v556, %v572
  %v581 = vsub.f32 %v557, %v573
  %v582 = vsub.f32 %v558, %v574
  %v583 = vsub.f32 %v559, %v575
  %v584 = vsub.f32 %v560, %v576
  %v585 = vsub.f32 %v561, %v577
  %v586 = vmul.f32 %v538, %v52
  %v587 = vmul.f32 %v539, %v52
  %v588 = vmul.f32 %v540, %v52
  %v589 = vmul.f32 %v541, %v52
  %v590 = vmul.f32 %v542, %v52
  %v591 = vmul.f32 %v543, %v52
  %v592 = vmul.f32 %v544, %v52
  %v593 = vmul.f32 %v545, %v52
  %v594 = vadd.f32 %v530, %v586
  %v595 = vadd.f32 %v531, %v587
  %v596 = vadd.f32 %v532, %v588
  %v597 = vadd.f32 %v533, %v589
  %v598 = vadd.f32 %v534, %v590
  %v599 = vadd.f32 %v535, %v591
  %v600 = vadd.f32 %v536, %v592
  %v601 = vadd.f32 %v537, %v593
  %v602 = vmul.f32 %v562, %v44
  %v603 = vmul.f32 %v563, %v44
  %v604 = vmul.f32 %v564, %v44
  %v605 = vmul.f32 %v565, %v44
  %v606 = vmul.f32 %v566, %v44
  %v607 = vmul.f32 %v567, %v44
  %v608 = vmul.f32 %v568, %v44
  %v609 = vmul.f32 %v569, %v44
  %v610 = vadd.f32 %v594, %v602
  %v611 = vadd.f32 %v595, %v603
  %v612 = vadd.f32 %v596, %v604
  %v613 = vadd.f32 %v597, %v605
  %v614 = vadd.f32 %v598, %v606
  %v615 = vadd.f32 %v599, %v607
  %v616 = vadd.f32 %v600, %v608
  %v617 = vadd.f32 %v601, %v609
  %v618 = vperm.slane %v22, 7
  %v619 = vperm.slane %v23, 7
  %v620 = vperm.slane %v24, 7
  %v621 = vperm.slane %v25, 7
  %v622 = vperm.slane %v26, 7
  %v623 = vperm.slane %v27, 7
  %v624 = vperm.slane %v28, 7
  %v625 = vperm.slane %v29, 7
  %v626 = vmul.f32 %v618, %v45
  %v627 = vmul.f32 %v619, %v45
  %v628 = vmul.f32 %v620, %v45
  %v629 = vmul.f32 %v621, %v45
  %v630 = vmul.f32 %v622, %v45
  %v631 = vmul.f32 %v623, %v45
  %v632 = vmul.f32 %v624, %v45
  %v633 = vmul.f32 %v625, %v45
  %v634 = vadd.f32 %v578, %v626
  %v635 = vadd.f32 %v579, %v627
  %v636 = vadd.f32 %v580, %v628
  %v637 = vadd.f32 %v581, %v629
  %v638 = vadd.f32 %v582, %v630
  %v639 = vadd.f32 %v583, %v631
  %v640 = vadd.f32 %v584, %v632
  %v641 = vadd.f32 %v585, %v633
  %v642 = vperm.slane %v30, 7
  %v643 = vperm.slane %v31, 7
  %v644 = vperm.slane %v32, 7
  %v645 = vperm.slane %v33, 7
  %v646 = vperm.slane %v34, 7
  %v647 = vperm.slane %v35, 7
  %v648 = vperm.slane %v36, 7
  %v649 = vperm.slane %v37, 7
  %v650 = vmul.f32 %v642, %v53
  %v651 = vmul.f32 %v643, %v53
  %v652 = vmul.f32 %v644, %v53
  %v653 = vmul.f32 %v645, %v53
  %v654 = vmul.f32 %v646, %v53
  %v655 = vmul.f32 %v647, %v53
  %v656 = vmul.f32 %v648, %v53
  %v657 = vmul.f32 %v649, %v53
  %v658 = vsub.f32 %v634, %v650
  %v659 = vsub.f32 %v635, %v651
  %v660 = vsub.f32 %v636, %v652
  %v661 = vsub.f32 %v637, %v653
  %v662 = vsub.f32 %v638, %v654
  %v663 = vsub.f32 %v639, %v655
  %v664 = vsub.f32 %v640, %v656
  %v665 = vsub.f32 %v641, %v657
  %v666 = vmul.f32 %v618, %v53
  %v667 = vmul.f32 %v619, %v53
  %v668 = vmul.f32 %v620, %v53
  %v669 = vmul.f32 %v621, %v53
  %v670 = vmul.f32 %v622, %v53
  %v671 = vmul.f32 %v623, %v53
  %v672 = vmul.f32 %v624, %v53
  %v673 = vmul.f32 %v625, %v53
  %v674 = vadd.f32 %v610, %v666
  %v675 = vadd.f32 %v611, %v667
  %v676 = vadd.f32 %v612, %v668
  %v677 = vadd.f32 %v613, %v669
  %v678 = vadd.f32 %v614, %v670
  %v679 = vadd.f32 %v615, %v671
  %v680 = vadd.f32 %v616, %v672
  %v681 = vadd.f32 %v617, %v673
  %v682 = vmul.f32 %v642, %v45
  %v683 = vmul.f32 %v643, %v45
  %v684 = vmul.f32 %v644, %v45
  %v685 = vmul.f32 %v645, %v45
  %v686 = vmul.f32 %v646, %v45
  %v687 = vmul.f32 %v647, %v45
  %v688 = vmul.f32 %v648, %v45
  %v689 = vmul.f32 %v649, %v45
  %v690 = vadd.f32 %v674, %v682
  %v691 = vadd.f32 %v675, %v683
  %v692 = vadd.f32 %v676, %v684
  %v693 = vadd.f32 %v677, %v685
  %v694 = vadd.f32 %v678, %v686
  %v695 = vadd.f32 %v679, %v687
  %v696 = vadd.f32 %v680, %v688
  %v697 = vadd.f32 %v681, %v689
  %v698 = vperm.slane %v658, 0
  %v699 = vperm.slane %v659, 0
  %v700 = vperm.slane %v660, 0
  %v701 = vperm.slane %v661, 0
  %v702 = vperm.slane %v662, 0
  %v703 = vperm.slane %v663, 0
  %v704 = vperm.slane %v664, 0
  %v705 = vperm.slane %v665, 0
  %707 = vset.pattern.permute.xlu0 0
  %708 = vperm.xlu0 %707, %v54
  %v709 = vpop.permute.xlu0 %708
  %v711 = vmul.f32 %v698, %v709
  %v712 = vmul.f32 %v699, %v709
  %v713 = vmul.f32 %v700, %v709
  %v714 = vmul.f32 %v701, %v709
  %v715 = vmul.f32 %v702, %v709
  %v716 = vmul.f32 %v703, %v709
  %v717 = vmul.f32 %v704, %v709
  %v718 = vmul.f32 %v705, %v709
  %v719 = vadd.f32 %v711, 0.0
  %v720 = vadd.f32 %v712, 0.0
  %v721 = vadd.f32 %v713, 0.0
  %v722 = vadd.f32 %v714, 0.0
  %v723 = vadd.f32 %v715, 0.0
  %v724 = vadd.f32 %v716, 0.0
  %v725 = vadd.f32 %v717, 0.0
  %v726 = vadd.f32 %v718, 0.0
  %v727 = vperm.slane %v690, 0
  %v728 = vperm.slane %v691, 0
  %v729 = vperm.slane %v692, 0
  %v730 = vperm.slane %v693, 0
  %v731 = vperm.slane %v694, 0
  %v732 = vperm.slane %v695, 0
  %v733 = vperm.slane %v696, 0
  %v734 = vperm.slane %v697, 0
  %v735 = vmul.f32 %v727, %v709
  %v736 = vmul.f32 %v728, %v709
  %v737 = vmul.f32 %v729, %v709
  %v738 = vmul.f32 %v730, %v709
  %v739 = vmul.f32 %v731, %v709
  %v740 = vmul.f32 %v732, %v709
  %v741 = vmul.f32 %v733, %v709
  %v742 = vmul.f32 %v734, %v709
  %v743 = vadd.f32 %v735, 0.0
  %v744 = vadd.f32 %v736, 0.0
  %v745 = vadd.f32 %v737, 0.0
  %v746 = vadd.f32 %v738, 0.0
  %v747 = vadd.f32 %v739, 0.0
  %v748 = vadd.f32 %v740, 0.0
  %v749 = vadd.f32 %v741, 0.0
  %v750 = vadd.f32 %v742, 0.0
  %v751 = vperm.slane %v658, 1
  %v752 = vperm.slane %v659, 1
  %v753 = vperm.slane %v660, 1
  %v754 = vperm.slane %v661, 1
  %v755 = vperm.slane %v662, 1
  %v756 = vperm.slane %v663, 1
  %v757 = vperm.slane %v664, 1
  %v758 = vperm.slane %v665, 1
  %760 = vset.pattern.permute.xlu0 0
  %761 = vperm.xlu0 %760, %v55
  %v762 = vpop.permute.xlu0 %761
  %v764 = vmul.f32 %v751, %v762
  %v765 = vmul.f32 %v752, %v762
  %v766 = vmul.f32 %v753, %v762
  %v767 = vmul.f32 %v754, %v762
  %v768 = vmul.f32 %v755, %v762
  %v769 = vmul.f32 %v756, %v762
  %v770 = vmul.f32 %v757, %v762
  %v771 = vmul.f32 %v758, %v762
  %v772 = vadd.f32 %v719, %v764
  %v773 = vadd.f32 %v720, %v765
  %v774 = vadd.f32 %v721, %v766
  %v775 = vadd.f32 %v722, %v767
  %v776 = vadd.f32 %v723, %v768
  %v777 = vadd.f32 %v724, %v769
  %v778 = vadd.f32 %v725, %v770
  %v779 = vadd.f32 %v726, %v771
  %v780 = vperm.slane %v690, 1
  %v781 = vperm.slane %v691, 1
  %v782 = vperm.slane %v692, 1
  %v783 = vperm.slane %v693, 1
  %v784 = vperm.slane %v694, 1
  %v785 = vperm.slane %v695, 1
  %v786 = vperm.slane %v696, 1
  %v787 = vperm.slane %v697, 1
  %v788 = vmul.f32 %v780, %v762
  %v789 = vmul.f32 %v781, %v762
  %v790 = vmul.f32 %v782, %v762
  %v791 = vmul.f32 %v783, %v762
  %v792 = vmul.f32 %v784, %v762
  %v793 = vmul.f32 %v785, %v762
  %v794 = vmul.f32 %v786, %v762
  %v795 = vmul.f32 %v787, %v762
  %v796 = vadd.f32 %v743, %v788
  %v797 = vadd.f32 %v744, %v789
  %v798 = vadd.f32 %v745, %v790
  %v799 = vadd.f32 %v746, %v791
  %v800 = vadd.f32 %v747, %v792
  %v801 = vadd.f32 %v748, %v793
  %v802 = vadd.f32 %v749, %v794
  %v803 = vadd.f32 %v750, %v795
  %v804 = vperm.slane %v658, 2
  %v805 = vperm.slane %v659, 2
  %v806 = vperm.slane %v660, 2
  %v807 = vperm.slane %v661, 2
  %v808 = vperm.slane %v662, 2
  %v809 = vperm.slane %v663, 2
  %v810 = vperm.slane %v664, 2
  %v811 = vperm.slane %v665, 2
  %813 = vset.pattern.permute.xlu0 0
  %814 = vperm.xlu0 %813, %v56
  %v815 = vpop.permute.xlu0 %814
  %v817 = vmul.f32 %v804, %v815
  %v818 = vmul.f32 %v805, %v815
  %v819 = vmul.f32 %v806, %v815
  %v820 = vmul.f32 %v807, %v815
  %v821 = vmul.f32 %v808, %v815
  %v822 = vmul.f32 %v809, %v815
  %v823 = vmul.f32 %v810, %v815
  %v824 = vmul.f32 %v811, %v815
  %v825 = vadd.f32 %v772, %v817
  %v826 = vadd.f32 %v773, %v818
  %v827 = vadd.f32 %v774, %v819
  %v828 = vadd.f32 %v775, %v820
  %v829 = vadd.f32 %v776, %v821
  %v830 = vadd.f32 %v777, %v822
  %v831 = vadd.f32 %v778, %v823
  %v832 = vadd.f32 %v779, %v824
  %v833 = vperm.slane %v690, 2
  %v834 = vperm.slane %v691, 2
  %v835 = vperm.slane %v692, 2
  %v836 = vperm.slane %v693, 2
  %v837 = vperm.slane %v694, 2
  %v838 = vperm.slane %v695, 2
  %v839 = vperm.slane %v696, 2
  %v840 = vperm.slane %v697, 2
  %v841 = vmul.f32 %v833, %v815
  %v842 = vmul.f32 %v834, %v815
  %v843 = vmul.f32 %v835, %v815
  %v844 = vmul.f32 %v836, %v815
  %v845 = vmul.f32 %v837, %v815
  %v846 = vmul.f32 %v838, %v815
  %v847 = vmul.f32 %v839, %v815
  %v848 = vmul.f32 %v840, %v815
  %v849 = vadd.f32 %v796, %v841
  %v850 = vadd.f32 %v797, %v842
  %v851 = vadd.f32 %v798, %v843
  %v852 = vadd.f32 %v799, %v844
  %v853 = vadd.f32 %v800, %v845
  %v854 = vadd.f32 %v801, %v846
  %v855 = vadd.f32 %v802, %v847
  %v856 = vadd.f32 %v803, %v848
  %v857 = vperm.slane %v658, 3
  %v858 = vperm.slane %v659, 3
  %v859 = vperm.slane %v660, 3
  %v860 = vperm.slane %v661, 3
  %v861 = vperm.slane %v662, 3
  %v862 = vperm.slane %v663, 3
  %v863 = vperm.slane %v664, 3
  %v864 = vperm.slane %v665, 3
  %866 = vset.pattern.permute.xlu0 0
  %867 = vperm.xlu0 %866, %v57
  %v868 = vpop.permute.xlu0 %867
  %v870 = vmul.f32 %v857, %v868
  %v871 = vmul.f32 %v858, %v868
  %v872 = vmul.f32 %v859, %v868
  %v873 = vmul.f32 %v860, %v868
  %v874 = vmul.f32 %v861, %v868
  %v875 = vmul.f32 %v862, %v868
  %v876 = vmul.f32 %v863, %v868
  %v877 = vmul.f32 %v864, %v868
  %v878 = vadd.f32 %v825, %v870
  %v879 = vadd.f32 %v826, %v871
  %v880 = vadd.f32 %v827, %v872
  %v881 = vadd.f32 %v828, %v873
  %v882 = vadd.f32 %v829, %v874
  %v883 = vadd.f32 %v830, %v875
  %v884 = vadd.f32 %v831, %v876
  %v885 = vadd.f32 %v832, %v877
  %v886 = vperm.slane %v690, 3
  %v887 = vperm.slane %v691, 3
  %v888 = vperm.slane %v692, 3
  %v889 = vperm.slane %v693, 3
  %v890 = vperm.slane %v694, 3
  %v891 = vperm.slane %v695, 3
  %v892 = vperm.slane %v696, 3
  %v893 = vperm.slane %v697, 3
  %v894 = vmul.f32 %v886, %v868
  %v895 = vmul.f32 %v887, %v868
  %v896 = vmul.f32 %v888, %v868
  %v897 = vmul.f32 %v889, %v868
  %v898 = vmul.f32 %v890, %v868
  %v899 = vmul.f32 %v891, %v868
  %v900 = vmul.f32 %v892, %v868
  %v901 = vmul.f32 %v893, %v868
  %v902 = vadd.f32 %v849, %v894
  %v903 = vadd.f32 %v850, %v895
  %v904 = vadd.f32 %v851, %v896
  %v905 = vadd.f32 %v852, %v897
  %v906 = vadd.f32 %v853, %v898
  %v907 = vadd.f32 %v854, %v899
  %v908 = vadd.f32 %v855, %v900
  %v909 = vadd.f32 %v856, %v901
  %vm910 = vcmask 97280
  %911 = vst.msk [vmem:[%s5] sm:$0xff] %vm910, %v878
  %912 = vst.msk [vmem:[%s5 + $0x8] sm:$0xff] %vm910, %v879
  %913 = vst.msk [vmem:[%s5 + $0x10] sm:$0xff] %vm910, %v880
  %914 = vst.msk [vmem:[%s5 + $0x18] sm:$0xff] %vm910, %v881
  %915 = vst.msk [vmem:[%s5 + $0x20] sm:$0xff] %vm910, %v882
  %916 = vst.msk [vmem:[%s5 + $0x28] sm:$0xff] %vm910, %v883
  %917 = vst.msk [vmem:[%s5 + $0x30] sm:$0xff] %vm910, %v884
  %918 = vst.msk [vmem:[%s5 + $0x38] sm:$0xff] %vm910, %v885
  %919 = vst.msk [vmem:[%s6] sm:$0xff] %vm910, %v902
  %920 = vst.msk [vmem:[%s6 + $0x8] sm:$0xff] %vm910, %v903
  %921 = vst.msk [vmem:[%s6 + $0x10] sm:$0xff] %vm910, %v904
  %922 = vst.msk [vmem:[%s6 + $0x18] sm:$0xff] %vm910, %v905
  %923 = vst.msk [vmem:[%s6 + $0x20] sm:$0xff] %vm910, %v906
  %924 = vst.msk [vmem:[%s6 + $0x28] sm:$0xff] %vm910, %v907
  %925 = vst.msk [vmem:[%s6 + $0x30] sm:$0xff] %vm910, %v908
  %926 = vst.msk [vmem:[%s6 + $0x38] sm:$0xff] %vm910, %v909
  // Predicated region
  $region22: #{t_spectral_conv.1} parent=0 // pred_check
    _
  $region23: #{t_spectral_conv.1} parent=0 // pred_check_branch
    %928 = sbr.rel (0) target = $region25
  $region24: #{t_spectral_conv.1} parent=0 // pred_region
    _
  $region25: #{t_spectral_conv.1} parent=0 // pred_fallthru
    _
  // Predicated region
  $region26: #{t_spectral_conv.1} parent=0 // pred_check
    _
  $region27: #{t_spectral_conv.1} parent=0 // pred_check_branch
    %930 = sbr.rel (0) target = $region29
  $region28: #{t_spectral_conv.1} parent=0 // pred_region
    _
  $region29: #{t_spectral_conv.1} parent=0 // pred_fallthru
    _
  // Predicated region
  $region30: #{t_spectral_conv.1} parent=0 // pred_check
    _
  $region31: #{t_spectral_conv.1} parent=0 // pred_check_branch
    %932 = sbr.rel (0) target = $region33
  $region32: #{t_spectral_conv.1} parent=0 // pred_region
    _
  $region33: #{t_spectral_conv.1} parent=0 // pred_fallthru
    _
  // Predicated region
  $region34: #{t_spectral_conv.1} parent=0 // pred_check
    _
  $region35: #{t_spectral_conv.1} parent=0 // pred_check_branch
    %934 = sbr.rel (0) target = $region37
  $region36: #{t_spectral_conv.1} parent=0 // pred_region
    _
  $region37: #{t_spectral_conv.1} parent=0 // pred_fallthru
    _

</llo_original>
